<compile_context>
chip_gen: v7x
topology: tpu7x:2x2x1
jax: 0.10.0
libtpu: 0.0.40
codegen_flags: <defaults>
</compile_context>

<pallas_src>
import functools

import jax
import jax.numpy as jnp
from jax.experimental import pallas as pl
from jax.experimental.pallas import tpu as pltpu


def _class_attention_kernel(x_ref, wq_ref, wkv_ref, wp_ref, bp_ref, hseg_ref,
                            o_ref, *, scale):
    bb, N, C = x_ref.shape
    x = x_ref[...]                                            # (bb, N, C) f32

    # Fused K/V projection: one MXU push, 2C-wide output (lane-dense).
    xf = x.reshape(bb * N, C).astype(jnp.bfloat16)
    kv = jnp.dot(xf, wkv_ref[...],
                 preferred_element_type=jnp.float32)          # (bb*N, 2C)
    k = kv[:, :C].reshape(bb, N, C)
    v = kv[:, C:].reshape(bb, N, C)

    # Q only for the class row of each batch element (scale folded in).
    q = jnp.dot(x[:, 0, :].astype(jnp.bfloat16), wq_ref[...],
                preferred_element_type=jnp.float32) * scale   # (bb, C)

    # Per-head attention scores without a per-head loop:
    #   raw[b,n,c] = q[b,c] * k[b,n,c]            (VPU)
    #   s[b,n,c]   = sum_{c' in head(c)} raw[b,n,c']  via one matmul with a
    #                constant block-diagonal (C, C) matrix -> the score of
    #                head h is replicated across its head_dim lanes.
    raw = k * q[:, None, :]                                   # (bb, N, C)
    s = jnp.dot(raw.reshape(bb * N, C), hseg_ref[...],
                preferred_element_type=jnp.float32).reshape(bb, N, C)

    # Softmax over the key axis (axis=1), independently per head (lanes are
    # head-replicated so plain lane-wise ops give the per-head softmax).
    s = s - jnp.max(s, axis=1, keepdims=True)
    p = jnp.exp(s)
    attn = p / jnp.sum(p, axis=1, keepdims=True)              # (bb, N, C)

    # Context vector: attention-weighted sum over keys of V.
    ctx = jnp.sum(attn * v, axis=1)                           # (bb, C)

    out = jnp.dot(ctx.astype(jnp.bfloat16), wp_ref[...],
                  preferred_element_type=jnp.float32) + bp_ref[...]   # (bb, C)
    o_ref[...] = out[:, None, :].astype(o_ref.dtype)          # (bb, 1, C)


def class_attention(x, params, *, num_heads, block_b=None):
    """x: (B, N, C) f32 -> (B, 1, C) f32  (ClassAttention.forward, eval mode)."""
    B, N, C = x.shape
    assert C % num_heads == 0
    head_dim = C // num_heads
    scale = head_dim ** -0.5

    if block_b is None:
        # Fold batch rows per block, but keep >=2 parallel grid steps when
        # possible so both v7x TensorCores get work (v5e/v6e: sequential loop).
        block_b = B // 2 if (B >= 2 and B % 2 == 0) else 1
    assert B % block_b == 0
    num_blocks = B // block_b

    # bf16 matmul operands; accumulation stays f32 via preferred_element_type.
    wq = params['wq'].astype(jnp.bfloat16)                         # (C, C)
    wkv = jnp.concatenate([params['wk'], params['wv']], axis=1
                          ).astype(jnp.bfloat16)                   # (C, 2C)
    wp = params['wp'].astype(jnp.bfloat16)                         # (C, C)
    bp = params['bp'].reshape(1, C).astype(jnp.float32)            # (1, C)

    # Constant block-diagonal per-head reduction matrix (kept f32 for accuracy).
    lane = jnp.arange(C)
    hseg = (lane[:, None] // head_dim == lane[None, :] // head_dim
            ).astype(jnp.float32)                                  # (C, C)

    def wspec(a):
        return pl.BlockSpec(a.shape, lambda b, _n=a.ndim: (0,) * _n)

    return pl.pallas_call(
        functools.partial(_class_attention_kernel, scale=scale),
        out_shape=jax.ShapeDtypeStruct((B, 1, C), jnp.float32),
        grid=(num_blocks,),
        in_specs=[pl.BlockSpec((block_b, N, C), lambda b: (b, 0, 0)),
                  wspec(wq), wspec(wkv), wspec(wp), wspec(bp), wspec(hseg)],
        out_specs=pl.BlockSpec((block_b, 1, C), lambda b: (b, 0, 0)),
        compiler_params=pltpu.CompilerParams(
            dimension_semantics=("parallel",),
            vmem_limit_bytes=64 * 1024 * 1024),
    )(x, wq, wkv, wp, bp, hseg)


# ---------------------------------------------------------------------------
# Pure-JAX reference mirroring the PyTorch forward (for a sanity check).
# ---------------------------------------------------------------------------
def class_attention_ref(x, params, *, num_heads):
    B, N, C = x.shape
    hd = C // num_heads
    scale = hd ** -0.5
    q = (x[:, 0] @ params['wq']).reshape(B, 1, num_heads, hd).transpose(0, 2, 1, 3)
    k = (x @ params['wk']).reshape(B, N, num_heads, hd).transpose(0, 2, 1, 3)
    v = (x @ params['wv']).reshape(B, N, num_heads, hd).transpose(0, 2, 1, 3)
    attn = jax.nn.softmax((q * scale) @ jnp.swapaxes(k, -2, -1), axis=-1)
    x_cls = jnp.swapaxes(attn @ v, 1, 2).reshape(B, 1, C)
    return x_cls @ params['wp'] + params['bp'].reshape(1, 1, C)


# ---------------------------------------------------------------------------
if __name__ == "__main__":
    key = jax.random.PRNGKey(0)
    kx, k1, k2, k3, k4 = jax.random.split(key, 5)

    # Small shapes consistent with the module.
    B, N, C = 2, 8, 64
    num_heads = 8          # module default

    x = jax.random.normal(kx, (B, N, C), jnp.float32)

    # Module init: trunc_normal_(std=0.02) weights, zero bias; qkv_bias=False,
    # proj has a (zero-initialized) bias.  Weights stored as (in, out).
    std = 0.02
    params = dict(
        wq=jax.random.normal(k1, (C, C), jnp.float32) * std,
        wk=jax.random.normal(k2, (C, C), jnp.float32) * std,
        wv=jax.random.normal(k3, (C, C), jnp.float32) * std,
        wp=jax.random.normal(k4, (C, C), jnp.float32) * std,
        bp=jnp.zeros((C,), jnp.float32),
    )

    out = class_attention(x, params, num_heads=num_heads)
    out = jax.block_until_ready(out)
    assert out.shape == (B, 1, C)
    assert bool(jnp.all(jnp.isfinite(out)))

    ref = class_attention_ref(x, params, num_heads=num_heads)
    # bf16 matmul operands (f32 accumulation) -> loose-but-safe tolerance.
    assert bool(jnp.allclose(out, ref, rtol=5e-2, atol=2e-3)), (
        "max abs diff = %f" % float(jnp.max(jnp.abs(out - ref))))

    print("KERNEL_OK")
</pallas_src>

<mosaic_0001>
module attributes {stable_mosaic.version = 11 : i64} {
  func.func @_class_attention_kernel(%arg0: i32, %arg1: memref<1x8x64xf32, #tpu.memory_space<vmem>>, %arg2: memref<64x64xbf16, #tpu.memory_space<vmem>>, %arg3: memref<64x128xbf16, #tpu.memory_space<vmem>>, %arg4: memref<64x64xbf16, #tpu.memory_space<vmem>>, %arg5: memref<1x64xf32, #tpu.memory_space<vmem>>, %arg6: memref<64x64xf32, #tpu.memory_space<vmem>>, %arg7: memref<1x1x64xf32, #tpu.memory_space<vmem>>) attributes {dimension_semantics = [#tpu.dimension_semantics<parallel>], iteration_bounds = array<i64: 2>, scalar_prefetch = 0 : i64, scratch_operands = 0 : i64, tpu.core_type = #tpu.core_type<tc>, window_params = [{transform_indices = @transform_0, window_bounds = array<i64: 1, 8, 64>}, {pipeline_mode = #tpu.pipeline_mode<synchronous>, transform_indices = @transform_1, window_bounds = array<i64: 64, 64>}, {pipeline_mode = #tpu.pipeline_mode<synchronous>, transform_indices = @transform_2, window_bounds = array<i64: 64, 128>}, {pipeline_mode = #tpu.pipeline_mode<synchronous>, transform_indices = @transform_3, window_bounds = array<i64: 64, 64>}, {pipeline_mode = #tpu.pipeline_mode<synchronous>, transform_indices = @transform_4, window_bounds = array<i64: 1, 64>}, {pipeline_mode = #tpu.pipeline_mode<synchronous>, transform_indices = @transform_5, window_bounds = array<i64: 64, 64>}, {transform_indices = @transform_6, window_bounds = array<i64: 1, 1, 64>}]} {
    %c0 = arith.constant 0 : index
    %c0_0 = arith.constant 0 : index
    %c0_1 = arith.constant 0 : index
    %0 = vector.load %arg1[%c0, %c0_0, %c0_1] : memref<1x8x64xf32, #tpu.memory_space<vmem>>, vector<1x8x64xf32>
    %1 = vector.shape_cast %0 : vector<1x8x64xf32> to vector<8x64xf32>
    %2 = arith.truncf %1 : vector<8x64xf32> to vector<8x64xbf16>
    %c0_2 = arith.constant 0 : index
    %c0_3 = arith.constant 0 : index
    %3 = vector.load %arg3[%c0_2, %c0_3] : memref<64x128xbf16, #tpu.memory_space<vmem>>, vector<64x128xbf16>
    %cst = arith.constant dense<0.000000e+00> : vector<8x128xf32>
    %4 = tpu.matmul %2, %3, %cst {dimension_numbers = #tpu.dot_dimension_numbers<[1], [0], [0], [1], [0, 0, 1, 1], [], []>} : vector<8x64xbf16>, vector<64x128xbf16>, vector<8x128xf32> -> vector<8x128xf32>
    %5 = vector.extract_strided_slice %4 {offsets = [0, 0], sizes = [8, 64], strides = [1, 1]} : vector<8x128xf32> to vector<8x64xf32>
    %6 = vector.shape_cast %5 : vector<8x64xf32> to vector<1x8x64xf32>
    %7 = vector.extract_strided_slice %4 {offsets = [0, 64], sizes = [8, 64], strides = [1, 1]} : vector<8x128xf32> to vector<8x64xf32>
    %8 = vector.shape_cast %7 : vector<8x64xf32> to vector<1x8x64xf32>
    %9 = vector.extract_strided_slice %0 {offsets = [0, 0, 0], sizes = [1, 1, 64], strides = [1, 1, 1]} : vector<1x8x64xf32> to vector<1x1x64xf32>
    %10 = vector.shape_cast %9 : vector<1x1x64xf32> to vector<1x64xf32>
    %11 = arith.truncf %10 : vector<1x64xf32> to vector<1x64xbf16>
    %c0_4 = arith.constant 0 : index
    %c0_5 = arith.constant 0 : index
    %12 = vector.load %arg2[%c0_4, %c0_5] : memref<64x64xbf16, #tpu.memory_space<vmem>>, vector<64x64xbf16>
    %cst_6 = arith.constant dense<0.000000e+00> : vector<1x64xf32>
    %13 = tpu.matmul %11, %12, %cst_6 {dimension_numbers = #tpu.dot_dimension_numbers<[1], [0], [0], [1], [0, 0, 1, 1], [], []>} : vector<1x64xbf16>, vector<64x64xbf16>, vector<1x64xf32> -> vector<1x64xf32>
    %cst_7 = arith.constant 0.353553385 : f32
    %14 = vector.broadcast %cst_7 : f32 to vector<1x64xf32>
    %15 = arith.mulf %13, %14 : vector<1x64xf32>
    %16 = vector.shape_cast %15 : vector<1x64xf32> to vector<1x1x64xf32>
    %17 = vector.broadcast %16 : vector<1x1x64xf32> to vector<1x8x64xf32>
    %18 = arith.mulf %6, %17 : vector<1x8x64xf32>
    %19 = vector.shape_cast %18 : vector<1x8x64xf32> to vector<8x64xf32>
    %c0_8 = arith.constant 0 : index
    %c0_9 = arith.constant 0 : index
    %20 = vector.load %arg6[%c0_8, %c0_9] : memref<64x64xf32, #tpu.memory_space<vmem>>, vector<64x64xf32>
    %cst_10 = arith.constant dense<0.000000e+00> : vector<8x64xf32>
    %21 = tpu.matmul %19, %20, %cst_10 {dimension_numbers = #tpu.dot_dimension_numbers<[1], [0], [0], [1], [0, 0, 1, 1], [], []>} : vector<8x64xf32>, vector<64x64xf32>, vector<8x64xf32> -> vector<8x64xf32>
    %22 = vector.shape_cast %21 : vector<8x64xf32> to vector<1x8x64xf32>
    %cst_11 = arith.constant dense<0xFF800000> : vector<1x64xf32>
    %23 = vector.multi_reduction <maximumf>, %22, %cst_11 [1] : vector<1x8x64xf32> to vector<1x64xf32>
    %24 = vector.shape_cast %23 : vector<1x64xf32> to vector<1x1x64xf32>
    %25 = vector.broadcast %24 : vector<1x1x64xf32> to vector<1x8x64xf32>
    %26 = arith.subf %22, %25 : vector<1x8x64xf32>
    %27 = math.exp %26 : vector<1x8x64xf32>
    %cst_12 = arith.constant dense<0.000000e+00> : vector<1x64xf32>
    %28 = vector.multi_reduction <add>, %27, %cst_12 [1] : vector<1x8x64xf32> to vector<1x64xf32>
    %29 = vector.shape_cast %28 : vector<1x64xf32> to vector<1x1x64xf32>
    %30 = vector.broadcast %29 : vector<1x1x64xf32> to vector<1x8x64xf32>
    %31 = arith.divf %27, %30 : vector<1x8x64xf32>
    %32 = arith.mulf %31, %8 : vector<1x8x64xf32>
    %cst_13 = arith.constant dense<0.000000e+00> : vector<1x64xf32>
    %33 = vector.multi_reduction <add>, %32, %cst_13 [1] : vector<1x8x64xf32> to vector<1x64xf32>
    %34 = arith.truncf %33 : vector<1x64xf32> to vector<1x64xbf16>
    %c0_14 = arith.constant 0 : index
    %c0_15 = arith.constant 0 : index
    %35 = vector.load %arg4[%c0_14, %c0_15] : memref<64x64xbf16, #tpu.memory_space<vmem>>, vector<64x64xbf16>
    %cst_16 = arith.constant dense<0.000000e+00> : vector<1x64xf32>
    %36 = tpu.matmul %34, %35, %cst_16 {dimension_numbers = #tpu.dot_dimension_numbers<[1], [0], [0], [1], [0, 0, 1, 1], [], []>} : vector<1x64xbf16>, vector<64x64xbf16>, vector<1x64xf32> -> vector<1x64xf32>
    %c0_17 = arith.constant 0 : index
    %c0_18 = arith.constant 0 : index
    %37 = vector.load %arg5[%c0_17, %c0_18] : memref<1x64xf32, #tpu.memory_space<vmem>>, vector<1x64xf32>
    %38 = arith.addf %36, %37 : vector<1x64xf32>
    %39 = vector.shape_cast %38 : vector<1x64xf32> to vector<1x1x64xf32>
    %c0_19 = arith.constant 0 : index
    %c0_20 = arith.constant 0 : index
    %c0_21 = arith.constant 0 : index
    %40 = vector.load %arg7[%c0_19, %c0_20, %c0_21] : memref<1x1x64xf32, #tpu.memory_space<vmem>>, vector<1x1x64xf32>
    tpu.vector_store %arg7[%c0_19, %c0_20, %c0_21], %39 {strides = array<i32>} : memref<1x1x64xf32, #tpu.memory_space<vmem>>, vector<1x1x64xf32>,
    return
  }
  func.func @transform_0(%arg0: i32) -> (i32, i32, i32) {
    %c0_i32 = arith.constant 0 : i32
    %c0_i32_0 = arith.constant 0 : i32
    %c0_i32_1 = arith.constant 0 : i32
    return %arg0, %c0_i32, %c0_i32_0 : i32, i32, i32
  }
  func.func @transform_1(%arg0: i32) -> (i32, i32) {
    %c0_i32 = arith.constant 0 : i32
    %c0_i32_0 = arith.constant 0 : i32
    %c0_i32_1 = arith.constant 0 : i32
    return %c0_i32, %c0_i32_0 : i32, i32
  }
  func.func @transform_2(%arg0: i32) -> (i32, i32) {
    %c0_i32 = arith.constant 0 : i32
    %c0_i32_0 = arith.constant 0 : i32
    %c0_i32_1 = arith.constant 0 : i32
    return %c0_i32, %c0_i32_0 : i32, i32
  }
  func.func @transform_3(%arg0: i32) -> (i32, i32) {
    %c0_i32 = arith.constant 0 : i32
    %c0_i32_0 = arith.constant 0 : i32
    %c0_i32_1 = arith.constant 0 : i32
    return %c0_i32, %c0_i32_0 : i32, i32
  }
  func.func @transform_4(%arg0: i32) -> (i32, i32) {
    %c0_i32 = arith.constant 0 : i32
    %c0_i32_0 = arith.constant 0 : i32
    %c0_i32_1 = arith.constant 0 : i32
    return %c0_i32, %c0_i32_0 : i32, i32
  }
  func.func @transform_5(%arg0: i32) -> (i32, i32) {
    %c0_i32 = arith.constant 0 : i32
    %c0_i32_0 = arith.constant 0 : i32
    %c0_i32_1 = arith.constant 0 : i32
    return %c0_i32, %c0_i32_0 : i32, i32
  }
  func.func @transform_6(%arg0: i32) -> (i32, i32, i32) {
    %c0_i32 = arith.constant 0 : i32
    %c0_i32_0 = arith.constant 0 : i32
    %c0_i32_1 = arith.constant 0 : i32
    return %arg0, %c0_i32, %c0_i32_0 : i32, i32, i32
  }
}

</mosaic_0001>

<llo_original>
// kernel: tpu_custom_call.1
$region0: #{tpu_custom_call.1}
  #allocation0 [shape = 'u32[]', space=smem, size = 0x4, offset = 0x4, fixed_abs, tag = 'smem constant byte address 0x4 - core index']
  #allocation1 [shape = 'u32[144,128]{1,0:T(1,128)}', space=vmem, size = 0x12000, scoped, tag = 'internal scratch']
  %s0 = inlined_call_operand.hbm [shape: f32[2,8,64], index: 0, kind: input, shape index: {}]
  %s1 = inlined_call_operand.hbm [shape: bf16[64,64], index: 1, kind: input, shape index: {}]
  %s2 = inlined_call_operand.hbm [shape: bf16[64,128], index: 2, kind: input, shape index: {}]
  %s3 = inlined_call_operand.hbm [shape: bf16[64,64], index: 3, kind: input, shape index: {}]
  %s4 = inlined_call_operand.hbm [shape: f32[1,64], index: 4, kind: input, shape index: {}]
  %s5 = inlined_call_operand.hbm [shape: f32[64,64], index: 5, kind: input, shape index: {}]
  %s6 = inlined_call_operand.hbm [shape: f32[2,1,64], index: 6, kind: output, shape index: {}]
  %s7 = sld [smem:[#allocation0]]
  $region81: #{tpu_custom_call.1} parent=0
    _
  %s9 = ssub.s32 1, %s7
  %s10 = scalar_select 0, %s9, %s7
  $region1: #{tpu_custom_call.1} parent=0
    #allocation2 [shape = 'u8[8192]{0}', space=vmem, size = 0x2000, scoped, tag = 'input window, operand 0']
    #allocation3 [shape = 's32[2]{0}', space=sflag, size = 0x8, scoped, tag = 'scoped memory for tpu_custom_call.1']
    #allocation4 [shape = 's32[2]{0}', space=sflag, size = 0x8, scoped, tag = 'scoped memory for tpu_custom_call.1']
    #allocation5 [shape = 'u8[16384]{0}', space=vmem, size = 0x4000, scoped, tag = 'input window, operand 1, single buffered']
    #allocation6 [shape = 's32[1]{0}', space=sflag, size = 0x4, scoped, tag = 'scoped memory for tpu_custom_call.1']
    #allocation7 [shape = 'u8[16384]{0}', space=vmem, size = 0x4000, scoped, tag = 'input window, operand 2, single buffered']
    #allocation8 [shape = 'u8[16384]{0}', space=vmem, size = 0x4000, scoped, tag = 'input window, operand 3, single buffered']
    #allocation9 [shape = 's32[1]{0}', space=sflag, size = 0x4, scoped, tag = 'scoped memory for tpu_custom_call.1']
    #allocation10 [shape = 'u8[512]{0}', space=vmem, size = 0x400, scoped, tag = 'input window, operand 4, single buffered']
    #allocation11 [shape = 'u8[32768]{0}', space=vmem, size = 0x8000, scoped, tag = 'input window, operand 5, single buffered']
    #allocation12 [shape = 's32[1]{0}', space=sflag, size = 0x4, scoped, tag = 'scoped memory for tpu_custom_call.1']
    #allocation13 [shape = 'u8[1024]{0}', space=vmem, size = 0x400, scoped, tag = 'output window, operand 0']
    %11 = vsyncpa [#allocation3], 0
    %s12 = scalar_lea.sflag [#allocation3], 1
    %13 = vsyncpa %s12, 0
    %14 = vsyncpa [#allocation6], 0
    %15 = vsyncpa [#allocation9], 0
    %16 = vsyncpa [#allocation12], 0
    %17 = vsyncpa [#allocation4], 0
    %s18 = scalar_lea.sflag [#allocation4], 1
    %19 = vsyncpa %s18, 0
    loop: start=0, step=1, limit=4
    $region2: #{tpu_custom_call.1} parent=1 // loop_pre_header
      _
    $region3: #{tpu_custom_call.1} parent=1 // loop_header
      %s21 = sphi 0, %s25
      %p22 = scmp.ge.s32.totalorder %s21, 4
      %s31 = sphi 0, %s33
      %s34 = sphi 0, %s31
      %s35 = sphi 0, %s34
      %s51 = sphi 0, %s35
      %s55 = sphi 0, %s55
      %s57 = sphi 0, %s55
      %s58 = sphi 0, %s57
      %s72 = sphi 0, %s58
      %s76 = sphi 0, %s76
      %s78 = sphi 0, %s76
      %s79 = sphi 0, %s78
      %s93 = sphi 0, %s79
      %s97 = sphi 0, %s97
      %s99 = sphi 0, %s97
      %s100 = sphi 0, %s99
      %s114 = sphi 0, %s100
      %s118 = sphi 0, %s118
      %s120 = sphi 0, %s118
      %s121 = sphi 0, %s120
      %s135 = sphi 0, %s121
      %s139 = sphi 0, %s139
      %s141 = sphi 0, %s139
      %s142 = sphi 0, %s141
      %s156 = sphi 0, %s142
      %s162 = sphi 0, %s164
      %s165 = sphi 0, %s162
      %s166 = sphi 0, %s165
      %s182 = sphi 0, %s166
    $region4: #{tpu_custom_call.1} parent=1 // loop_header_branch
      %24 = sbr.rel (%p22) target = $region8
    $region5: #{tpu_custom_call.1} parent=1 // loop_body
      %s26 = ssub.s32 %s21, 1
      %s27 = ssub.s32 %s21, 2
      %s28 = sadd.s32 %s21, 1
      %s29 = ssub.s32 %s21, %s28
      %p30 = scmp.eq.s32.totalorder %s29, 0
      %s32 = sadd.s32 %s31, 1
      %s33 = scalar_select %p30, %s31, %s32
      %p36 = pneg %p30
      %p37 = scmp.eq.s32.totalorder %s21, 1
      %p38 = por %p36, %p37
      %p39 = scmp.ne.s32.totalorder %s31, %s34
      %p40 = scmp.eq.s32.totalorder %s21, 0
      %p41 = por %p39, %p40
      %p42 = scmp.ne.s32.totalorder %s31, %s34
      %p43 = scmp.eq.s32.totalorder %s26, 1
      %p44 = por %p42, %p43
      %p45 = scmp.ne.s32.totalorder %s34, %s35
      %p46 = scmp.eq.s32.totalorder %s26, 0
      %p47 = por %p45, %p46
      %p48 = scmp.ne.s32.totalorder %s34, %s35
      %p49 = scmp.eq.s32.totalorder %s27, 1
      %p50 = por %p48, %p49
      %p52 = scmp.ne.s32.totalorder %s35, %s51
      %p53 = scmp.eq.s32.totalorder %s27, 0
      %p54 = por %p52, %p53
      %s56 = sadd.s32 %s55, 1
      %p59 = scmp.eq.s32.totalorder %s21, 1
      %p60 = scmp.ne.s32.totalorder %s55, %s57
      %p61 = scmp.eq.s32.totalorder %s21, 0
      %p62 = por %p60, %p61
      %p63 = scmp.ne.s32.totalorder %s55, %s57
      %p64 = scmp.eq.s32.totalorder %s26, 1
      %p65 = por %p63, %p64
      %p66 = scmp.ne.s32.totalorder %s57, %s58
      %p67 = scmp.eq.s32.totalorder %s26, 0
      %p68 = por %p66, %p67
      %p69 = scmp.ne.s32.totalorder %s57, %s58
      %p70 = scmp.eq.s32.totalorder %s27, 1
      %p71 = por %p69, %p70
      %p73 = scmp.ne.s32.totalorder %s58, %s72
      %p74 = scmp.eq.s32.totalorder %s27, 0
      %p75 = por %p73, %p74
      %s77 = sadd.s32 %s76, 1
      %p80 = scmp.eq.s32.totalorder %s21, 1
      %p81 = scmp.ne.s32.totalorder %s76, %s78
      %p82 = scmp.eq.s32.totalorder %s21, 0
      %p83 = por %p81, %p82
      %p84 = scmp.ne.s32.totalorder %s76, %s78
      %p85 = scmp.eq.s32.totalorder %s26, 1
      %p86 = por %p84, %p85
      %p87 = scmp.ne.s32.totalorder %s78, %s79
      %p88 = scmp.eq.s32.totalorder %s26, 0
      %p89 = por %p87, %p88
      %p90 = scmp.ne.s32.totalorder %s78, %s79
      %p91 = scmp.eq.s32.totalorder %s27, 1
      %p92 = por %p90, %p91
      %p94 = scmp.ne.s32.totalorder %s79, %s93
      %p95 = scmp.eq.s32.totalorder %s27, 0
      %p96 = por %p94, %p95
      %s98 = sadd.s32 %s97, 1
      %p101 = scmp.eq.s32.totalorder %s21, 1
      %p102 = scmp.ne.s32.totalorder %s97, %s99
      %p103 = scmp.eq.s32.totalorder %s21, 0
      %p104 = por %p102, %p103
      %p105 = scmp.ne.s32.totalorder %s97, %s99
      %p106 = scmp.eq.s32.totalorder %s26, 1
      %p107 = por %p105, %p106
      %p108 = scmp.ne.s32.totalorder %s99, %s100
      %p109 = scmp.eq.s32.totalorder %s26, 0
      %p110 = por %p108, %p109
      %p111 = scmp.ne.s32.totalorder %s99, %s100
      %p112 = scmp.eq.s32.totalorder %s27, 1
      %p113 = por %p111, %p112
      %p115 = scmp.ne.s32.totalorder %s100, %s114
      %p116 = scmp.eq.s32.totalorder %s27, 0
      %p117 = por %p115, %p116
      %s119 = sadd.s32 %s118, 1
      %p122 = scmp.eq.s32.totalorder %s21, 1
      %p123 = scmp.ne.s32.totalorder %s118, %s120
      %p124 = scmp.eq.s32.totalorder %s21, 0
      %p125 = por %p123, %p124
      %p126 = scmp.ne.s32.totalorder %s118, %s120
      %p127 = scmp.eq.s32.totalorder %s26, 1
      %p128 = por %p126, %p127
      %p129 = scmp.ne.s32.totalorder %s120, %s121
      %p130 = scmp.eq.s32.totalorder %s26, 0
      %p131 = por %p129, %p130
      %p132 = scmp.ne.s32.totalorder %s120, %s121
      %p133 = scmp.eq.s32.totalorder %s27, 1
      %p134 = por %p132, %p133
      %p136 = scmp.ne.s32.totalorder %s121, %s135
      %p137 = scmp.eq.s32.totalorder %s27, 0
      %p138 = por %p136, %p137
      %s140 = sadd.s32 %s139, 1
      %p143 = scmp.eq.s32.totalorder %s21, 1
      %p144 = scmp.ne.s32.totalorder %s139, %s141
      %p145 = scmp.eq.s32.totalorder %s21, 0
      %p146 = por %p144, %p145
      %p147 = scmp.ne.s32.totalorder %s139, %s141
      %p148 = scmp.eq.s32.totalorder %s26, 1
      %p149 = por %p147, %p148
      %p150 = scmp.ne.s32.totalorder %s141, %s142
      %p151 = scmp.eq.s32.totalorder %s26, 0
      %p152 = por %p150, %p151
      %p153 = scmp.ne.s32.totalorder %s141, %s142
      %p154 = scmp.eq.s32.totalorder %s27, 1
      %p155 = por %p153, %p154
      %p157 = scmp.ne.s32.totalorder %s142, %s156
      %p158 = scmp.eq.s32.totalorder %s27, 0
      %p159 = por %p157, %p158
      %s160 = ssub.s32 %s21, %s28
      %p161 = scmp.eq.s32.totalorder %s160, 0
      %s163 = sadd.s32 %s162, 1
      %s164 = scalar_select %p161, %s162, %s163
      %p167 = pneg %p161
      %p168 = scmp.eq.s32.totalorder %s21, 1
      %p169 = por %p167, %p168
      %p170 = scmp.ne.s32.totalorder %s162, %s165
      %p171 = scmp.eq.s32.totalorder %s21, 0
      %p172 = por %p170, %p171
      %p173 = scmp.ne.s32.totalorder %s162, %s165
      %p174 = scmp.eq.s32.totalorder %s26, 1
      %p175 = por %p173, %p174
      %p176 = scmp.ne.s32.totalorder %s165, %s166
      %p177 = scmp.eq.s32.totalorder %s26, 0
      %p178 = por %p176, %p177
      %p179 = scmp.ne.s32.totalorder %s165, %s166
      %p180 = scmp.eq.s32.totalorder %s27, 1
      %p181 = por %p179, %p180
      %p183 = scmp.ne.s32.totalorder %s166, %s182
      %p184 = scmp.eq.s32.totalorder %s27, 0
      %p185 = por %p183, %p184
      %p186 = scmp.le.s32.totalorder 1, %s21
      %p187 = scmp.lt.s32.totalorder %s21, 3
      %p188 = pnand %p186, %p187
      %p189 = pneg %p188
      // Predicated region
      $region9: #{tpu_custom_call.1} parent=5 // pred_check
        _
      $region10: #{tpu_custom_call.1} parent=5 // pred_check_branch
        %191 = sbr.rel (%p188) target = $region12
      $region11: #{tpu_custom_call.1} parent=5 // pred_region
        %s192 = ssub.s32 %s21, 1
        // Predicated region
        $region13: #{tpu_custom_call.1} parent=11 // pred_check
          %p193 = pneg %p68
        $region14: #{tpu_custom_call.1} parent=11 // pred_check_branch
          %195 = sbr.rel (%p193) target = $region16
        $region15: #{tpu_custom_call.1} parent=11 // pred_region
          %s197 = ssub.s32 512, 512
          %198 = vsyncadd [#allocation6], %s197
          %s199 = sshll.u32 [#allocation5], 4
          %s200 = int_to_ptr.vmem [resolvable:$true] %s199
          %205 = dma.hbm_to_vmem [thread:$0]  %s1, 512, %s200, [#allocation6], 64, 64, 4
        $region16: #{tpu_custom_call.1} parent=11 // pred_fallthru
          _
        // Predicated region
        $region17: #{tpu_custom_call.1} parent=11 // pred_check
          %p206 = pneg %p89
        $region18: #{tpu_custom_call.1} parent=11 // pred_check_branch
          %208 = sbr.rel (%p206) target = $region20
        $region19: #{tpu_custom_call.1} parent=11 // pred_region
          %s210 = ssub.s32 512, 512
          %211 = vsyncadd [#allocation6], %s210
          %s212 = sshll.u32 [#allocation7], 4
          %s213 = int_to_ptr.vmem [resolvable:$true] %s212
          %218 = dma.hbm_to_vmem [thread:$0]  %s2, 512, %s213, [#allocation6], 64, 64, 4
        $region20: #{tpu_custom_call.1} parent=11 // pred_fallthru
          _
        // Predicated region
        $region21: #{tpu_custom_call.1} parent=11 // pred_check
          %p219 = pneg %p110
        $region22: #{tpu_custom_call.1} parent=11 // pred_check_branch
          %221 = sbr.rel (%p219) target = $region24
        $region23: #{tpu_custom_call.1} parent=11 // pred_region
          %s223 = ssub.s32 512, 512
          %224 = vsyncadd [#allocation9], %s223
          %s225 = sshll.u32 [#allocation8], 4
          %s226 = int_to_ptr.vmem [resolvable:$true] %s225
          %231 = dma.hbm_to_vmem [thread:$0]  %s3, 512, %s226, [#allocation9], 64, 64, 4
        $region24: #{tpu_custom_call.1} parent=11 // pred_fallthru
          _
        // Predicated region
        $region25: #{tpu_custom_call.1} parent=11 // pred_check
          %p232 = pneg %p131
        $region26: #{tpu_custom_call.1} parent=11 // pred_check_branch
          %234 = sbr.rel (%p232) target = $region28
        $region27: #{tpu_custom_call.1} parent=11 // pred_region
          %s236 = ssub.s32 16, 16
          %237 = vsyncadd [#allocation9], %s236
          %s239 = sshll.u32 [#allocation10], 4
          %s240 = int_to_ptr.vmem [resolvable:$true] %s239
          %242 = dma.hbm_to_vmem [thread:$0]  %s4, 16, %s240, [#allocation9]
        $region28: #{tpu_custom_call.1} parent=11 // pred_fallthru
          _
        // Predicated region
        $region29: #{tpu_custom_call.1} parent=11 // pred_check
          %p243 = pneg %p152
        $region30: #{tpu_custom_call.1} parent=11 // pred_check_branch
          %245 = sbr.rel (%p243) target = $region32
        $region31: #{tpu_custom_call.1} parent=11 // pred_region
          %s247 = ssub.s32 1024, 1024
          %248 = vsyncadd [#allocation12], %s247
          %s249 = sshll.u32 [#allocation11], 4
          %s250 = int_to_ptr.vmem [resolvable:$true] %s249
          %255 = dma.hbm_to_vmem [thread:$0]  %s5, 1024, %s250, [#allocation12], 128, 128, 8
        $region32: #{tpu_custom_call.1} parent=11 // pred_fallthru
          _
      $region12: #{tpu_custom_call.1} parent=5 // pred_fallthru
        _
      %p256 = scmp.lt.s32.totalorder %s21, 2
      // Predicated region
      $region33: #{tpu_custom_call.1} parent=5 // pred_check
        %p257 = pneg %p256
      $region34: #{tpu_custom_call.1} parent=5 // pred_check_branch
        %259 = sbr.rel (%p257) target = $region36
      $region35: #{tpu_custom_call.1} parent=5 // pred_region
        // Predicated region
        $region37: #{tpu_custom_call.1} parent=35 // pred_check
          %p260 = pneg %p41
        $region38: #{tpu_custom_call.1} parent=35 // pred_check_branch
          %262 = sbr.rel (%p260) target = $region40
        $region39: #{tpu_custom_call.1} parent=35 // pred_region
          %s263 = sand.u32 %s31, 1
          %s264 = scalar_lea.sflag [#allocation3], %s263
          %s265 = sand.u32 %s31, 1
          %s266 = smul.addr %s265, 8
          %s267 = scalar_lea.vmem [#allocation2], %s266
          %s269 = ssub.s32 128, 128
          %270 = vsyncadd %s264, %s269
          %s271 = smul.addr %s21, 128
          %s272 = scalar_lea.hbm %s0, %s271
          %s274 = sshll.u32 %s267, 4
          %s275 = int_to_ptr.vmem [resolvable:$true] %s274
          %277 = dma.hbm_to_vmem [thread:$0]  %s272, 128, %s275, %s264
        $region40: #{tpu_custom_call.1} parent=35 // pred_fallthru
          _
      $region36: #{tpu_custom_call.1} parent=5 // pred_fallthru
        _
      %p278 = scmp.le.s32.totalorder 1, %s21
      %p279 = scmp.lt.s32.totalorder %s21, 3
      %p280 = pnand %p278, %p279
      %p281 = pneg %p280
      // Predicated region
      $region41: #{tpu_custom_call.1} parent=5 // pred_check
        _
      $region42: #{tpu_custom_call.1} parent=5 // pred_check_branch
        %283 = sbr.rel (%p280) target = $region44
      $region43: #{tpu_custom_call.1} parent=5 // pred_region
        %s284 = ssub.s32 %s21, 1
        %s285 = sand.u32 %s34, 1
        %s286 = scalar_lea.sflag [#allocation3], %s285
        %s287 = sand.u32 %s34, 1
        %s288 = smul.addr %s287, 8
        %s289 = scalar_lea.vmem [#allocation2], %s288
        // Predicated region
        $region45: #{tpu_custom_call.1} parent=43 // pred_check
          %p290 = pneg %p47
        $region46: #{tpu_custom_call.1} parent=43 // pred_check_branch
          %292 = sbr.rel (%p290) target = $region48
        $region47: #{tpu_custom_call.1} parent=43 // pred_region
          %293 = dma.done %s286, 128
        $region48: #{tpu_custom_call.1} parent=43 // pred_fallthru
          _
        // Predicated region
        $region49: #{tpu_custom_call.1} parent=43 // pred_check
          %p294 = pneg %p68
        $region50: #{tpu_custom_call.1} parent=43 // pred_check_branch
          %296 = sbr.rel (%p294) target = $region52
        $region51: #{tpu_custom_call.1} parent=43 // pred_region
          %297 = dma.done [#allocation6], 512
        $region52: #{tpu_custom_call.1} parent=43 // pred_fallthru
          _
        // Predicated region
        $region53: #{tpu_custom_call.1} parent=43 // pred_check
          %p298 = pneg %p89
        $region54: #{tpu_custom_call.1} parent=43 // pred_check_branch
          %300 = sbr.rel (%p298) target = $region56
        $region55: #{tpu_custom_call.1} parent=43 // pred_region
          %301 = dma.done [#allocation6], 512
        $region56: #{tpu_custom_call.1} parent=43 // pred_fallthru
          _
        // Predicated region
        $region57: #{tpu_custom_call.1} parent=43 // pred_check
          %p302 = pneg %p110
        $region58: #{tpu_custom_call.1} parent=43 // pred_check_branch
          %304 = sbr.rel (%p302) target = $region60
        $region59: #{tpu_custom_call.1} parent=43 // pred_region
          %305 = dma.done [#allocation9], 512
        $region60: #{tpu_custom_call.1} parent=43 // pred_fallthru
          _
        // Predicated region
        $region61: #{tpu_custom_call.1} parent=43 // pred_check
          %p306 = pneg %p131
        $region62: #{tpu_custom_call.1} parent=43 // pred_check_branch
          %308 = sbr.rel (%p306) target = $region64
        $region63: #{tpu_custom_call.1} parent=43 // pred_region
          %309 = dma.done [#allocation9], 16
        $region64: #{tpu_custom_call.1} parent=43 // pred_fallthru
          _
        // Predicated region
        $region65: #{tpu_custom_call.1} parent=43 // pred_check
          %p310 = pneg %p152
        $region66: #{tpu_custom_call.1} parent=43 // pred_check_branch
          %312 = sbr.rel (%p310) target = $region68
        $region67: #{tpu_custom_call.1} parent=43 // pred_region
          %313 = dma.done [#allocation12], 1024
        $region68: #{tpu_custom_call.1} parent=43 // pred_fallthru
          _
        %s314 = sand.u32 %s34, 1
        %s315 = scalar_lea.sflag [#allocation3], %s314
        %s316 = sand.u32 %s34, 1
        %s317 = smul.addr %s316, 8
        %s318 = scalar_lea.vmem [#allocation2], %s317
        %p319 = pneg %p47
        %p320 = pneg %p44
        %p321 = pneg %p68
        %p322 = pneg %p65
        %p323 = pneg %p89
        %p324 = pneg %p86
        %p325 = pneg %p110
        %p326 = pneg %p107
        %p327 = pneg %p131
        %p328 = pneg %p128
        %p329 = pneg %p152
        %p330 = pneg %p149
        %p331 = pneg %p178
        %p332 = pneg %p175
        %s333 = sand.u32 %s165, 1
        %s334 = scalar_lea.sflag [#allocation4], %s333
        %s335 = sand.u32 %s165, 1
        %s336 = scalar_lea.vmem [#allocation13], %s335
        %v338 = vld [vmem:[%s289] sm:$0xff]
        %v339 = vpack.c.bf16 %v338, %v338
        %v340 = vld [vmem:[#allocation7] sm:$0xf]
        %v341 = vld [vmem:[#allocation7 + $0x4] sm:$0xf]
        %v342 = vld [vmem:[#allocation7 + $0x8] sm:$0xf]
        %v343 = vld [vmem:[#allocation7 + $0xc] sm:$0xf]
        %v344 = vld [vmem:[#allocation7 + $0x10] sm:$0xf]
        %v345 = vld [vmem:[#allocation7 + $0x14] sm:$0xf]
        %v346 = vld [vmem:[#allocation7 + $0x18] sm:$0xf]
        %v347 = vld [vmem:[#allocation7 + $0x1c] sm:$0xf]
        %v356 = vunpack.c.l.b16 %v340
        %v357 = vunpack.c.l.b16 %v341
        %v358 = vunpack.c.l.b16 %v342
        %v359 = vunpack.c.l.b16 %v343
        %v360 = vunpack.c.l.b16 %v344
        %v361 = vunpack.c.l.b16 %v345
        %v362 = vunpack.c.l.b16 %v346
        %v363 = vunpack.c.l.b16 %v347
        %v364 = vpack.c.b16 %v357, %v356
        %v365 = vpack.c.b16 %v359, %v358
        %v366 = vpack.c.b16 %v361, %v360
        %v367 = vpack.c.b16 %v363, %v362
        %vm372 = vcmask 523264
        %v374 = vsel %vm372, %v339, 0
        %376 = vmatprep.subr.bf16.mxu0 0
        %377 = vmatpush1.bf16.msra.mxu0 %v364
        %378 = vmatprep.subr.bf16.mxu0 0
        %379 = vmatpush1.bf16.msra.mxu0 %v365
        %380 = vmatprep.subr.bf16.mxu0 0
        %381 = vmatpush1.bf16.msra.mxu0 %v366
        %382 = vmatprep.subr.bf16.mxu0 0
        %383 = vmatpush1.bf16.msra.mxu0 %v367
        %384 = vmatprep.subr.bf16.mxu0 0
        %385 = vmatpush1.bf16.msra.mxu0 0
        %386 = vmatprep.subr.bf16.mxu0 0
        %387 = vmatpush1.bf16.msra.mxu0 0
        %388 = vmatprep.subr.bf16.mxu0 0
        %389 = vmatpush1.bf16.msra.mxu0 0
        %390 = vmatprep.subr.bf16.mxu0 0
        %391 = vmatpush1.bf16.msra.mxu0 0
        %392 = vmatprep.subr.bf16.mxu0 0
        %393 = vmatpush1.bf16.msra.mxu0 0
        %394 = vmatprep.subr.bf16.mxu0 0
        %395 = vmatpush1.bf16.msra.mxu0 0
        %396 = vmatprep.subr.bf16.mxu0 0
        %397 = vmatpush1.bf16.msra.mxu0 0
        %398 = vmatprep.subr.bf16.mxu0 0
        %399 = vmatpush1.bf16.msra.mxu0 0
        %400 = vmatprep.subr.bf16.mxu0 0
        %401 = vmatpush1.bf16.msra.mxu0 0
        %402 = vmatprep.subr.bf16.mxu0 0
        %403 = vmatpush1.bf16.msra.mxu0 0
        %404 = vmatprep.subr.bf16.mxu0 0
        %405 = vmatpush1.bf16.msra.mxu0 0
        %406 = vmatprep.subr.bf16.mxu0 0
        %407 = vmatpush1.bf16.msra.mxu0 0
        %408 = vmatprep.mubr.bf16.mxu0 0
        %409 = vmatmul.mubr.bf16.gmra.mrb[0].mxu0 %v374
        %v410 = vpop.f32.mrb[0].mxu0
        %v411 = vadd.f32 0.0, %v410
        %v412 = vpop.f32.mrb[0].mxu0
        %v413 = vpop.f32.mrb[0].mxu0
        %v414 = vpop.f32.mrb[0].mxu0
        %415 = vdwg.mxu0
        %v416 = vld [vmem:[#allocation5] sm:$0xf]
        %v417 = vld [vmem:[#allocation5 + $0x4] sm:$0xf]
        %v418 = vld [vmem:[#allocation5 + $0x8] sm:$0xf]
        %v419 = vld [vmem:[#allocation5 + $0xc] sm:$0xf]
        %v420 = vld [vmem:[#allocation5 + $0x10] sm:$0xf]
        %v421 = vld [vmem:[#allocation5 + $0x14] sm:$0xf]
        %v422 = vld [vmem:[#allocation5 + $0x18] sm:$0xf]
        %v423 = vld [vmem:[#allocation5 + $0x1c] sm:$0xf]
        %v432 = vunpack.c.l.b16 %v416
        %v433 = vunpack.c.l.b16 %v417
        %v434 = vunpack.c.l.b16 %v418
        %v435 = vunpack.c.l.b16 %v419
        %v436 = vunpack.c.l.b16 %v420
        %v437 = vunpack.c.l.b16 %v421
        %v438 = vunpack.c.l.b16 %v422
        %v439 = vunpack.c.l.b16 %v423
        %v440 = vpack.c.b16 %v433, %v432
        %v441 = vpack.c.b16 %v435, %v434
        %v442 = vpack.c.b16 %v437, %v436
        %v443 = vpack.c.b16 %v439, %v438
        %448 = vmatprep.subr.bf16.mxu0 0
        %449 = vmatpush1.bf16.msra.mxu0 %v440
        %450 = vmatprep.subr.bf16.mxu0 0
        %451 = vmatpush1.bf16.msra.mxu0 %v441
        %452 = vmatprep.subr.bf16.mxu0 0
        %453 = vmatpush1.bf16.msra.mxu0 %v442
        %454 = vmatprep.subr.bf16.mxu0 0
        %455 = vmatpush1.bf16.msra.mxu0 %v443
        %456 = vmatprep.subr.bf16.mxu0 0
        %457 = vmatpush1.bf16.msra.mxu0 0
        %458 = vmatprep.subr.bf16.mxu0 0
        %459 = vmatpush1.bf16.msra.mxu0 0
        %460 = vmatprep.subr.bf16.mxu0 0
        %461 = vmatpush1.bf16.msra.mxu0 0
        %462 = vmatprep.subr.bf16.mxu0 0
        %463 = vmatpush1.bf16.msra.mxu0 0
        %464 = vmatprep.subr.bf16.mxu0 0
        %465 = vmatpush1.bf16.msra.mxu0 0
        %466 = vmatprep.subr.bf16.mxu0 0
        %467 = vmatpush1.bf16.msra.mxu0 0
        %468 = vmatprep.subr.bf16.mxu0 0
        %469 = vmatpush1.bf16.msra.mxu0 0
        %470 = vmatprep.subr.bf16.mxu0 0
        %471 = vmatpush1.bf16.msra.mxu0 0
        %472 = vmatprep.subr.bf16.mxu0 0
        %473 = vmatpush1.bf16.msra.mxu0 0
        %474 = vmatprep.subr.bf16.mxu0 0
        %475 = vmatpush1.bf16.msra.mxu0 0
        %476 = vmatprep.subr.bf16.mxu0 0
        %477 = vmatpush1.bf16.msra.mxu0 0
        %478 = vmatprep.subr.bf16.mxu0 0
        %479 = vmatpush1.bf16.msra.mxu0 0
        %480 = vmatprep.mubr.bf16.mxu0 0
        %481 = vmatmul.mubr.bf16.gmra.mrb[0].mxu0 %v374
        %v482 = vpop.f32.mrb[0].mxu0
        %v483 = vadd.f32 0.0, %v482
        %v484 = vpop.f32.mrb[0].mxu0
        %v485 = vpop.f32.mrb[0].mxu0
        %v486 = vpop.f32.mrb[0].mxu0
        %487 = vdwg.mxu0
        %v488 = vmul.f32 %v483, 0.35355338
        %v489 = vlaneseq
        %v490 = vshrl.u32 %v489, 7
        %v491 = vsub.s32 0, %v490
        %v492 = vrot.slane %v488, %v491
        %v493 = vmul.f32 %v411, %v492
        %v494 = vld [vmem:[#allocation11] sm:$0xff]
        %v495 = vld [vmem:[#allocation11 + $0x8] sm:$0xff]
        %v496 = vld [vmem:[#allocation11 + $0x10] sm:$0xff]
        %v497 = vld [vmem:[#allocation11 + $0x18] sm:$0xff]
        %v498 = vld [vmem:[#allocation11 + $0x20] sm:$0xff]
        %v499 = vld [vmem:[#allocation11 + $0x28] sm:$0xff]
        %v500 = vld [vmem:[#allocation11 + $0x30] sm:$0xff]
        %v501 = vld [vmem:[#allocation11 + $0x38] sm:$0xff]
        %v503 = vsel %vm372, %v493, 0
        %505 = vmatprep.subr.mxu0 0.0
        %506 = vmatpush1.msra.mxu0 %v494
        %507 = vmatprep.subr.mxu0 0.0
        %508 = vmatpush1.msra.mxu0 %v495
        %509 = vmatprep.subr.mxu0 0.0
        %510 = vmatpush1.msra.mxu0 %v496
        %511 = vmatprep.subr.mxu0 0.0
        %512 = vmatpush1.msra.mxu0 %v497
        %513 = vmatprep.subr.mxu0 0.0
        %514 = vmatpush1.msra.mxu0 %v498
        %515 = vmatprep.subr.mxu0 0.0
        %516 = vmatpush1.msra.mxu0 %v499
        %517 = vmatprep.subr.mxu0 0.0
        %518 = vmatpush1.msra.mxu0 %v500
        %519 = vmatprep.subr.mxu0 0.0
        %520 = vmatpush1.msra.mxu0 %v501
        %521 = vmatprep.subr.mxu0 0.0
        %522 = vmatpush1.msra.mxu0 0.0
        %523 = vmatprep.subr.mxu0 0.0
        %524 = vmatpush1.msra.mxu0 0.0
        %525 = vmatprep.subr.mxu0 0.0
        %526 = vmatpush1.msra.mxu0 0.0
        %527 = vmatprep.subr.mxu0 0.0
        %528 = vmatpush1.msra.mxu0 0.0
        %529 = vmatprep.subr.mxu0 0.0
        %530 = vmatpush1.msra.mxu0 0.0
        %531 = vmatprep.subr.mxu0 0.0
        %532 = vmatpush1.msra.mxu0 0.0
        %533 = vmatprep.subr.mxu0 0.0
        %534 = vmatpush1.msra.mxu0 0.0
        %535 = vmatprep.subr.mxu0 0.0
        %536 = vmatpush1.msra.mxu0 0.0
        %537 = vmatprep.subr.mxu0 0.0
        %538 = vmatpush1.msra.mxu0 0.0
        %539 = vmatprep.subr.mxu0 0.0
        %540 = vmatpush1.msra.mxu0 0.0
        %541 = vmatprep.subr.mxu0 0.0
        %542 = vmatpush1.msra.mxu0 0.0
        %543 = vmatprep.subr.mxu0 0.0
        %544 = vmatpush1.msra.mxu0 0.0
        %545 = vmatprep.subr.mxu0 0.0
        %546 = vmatpush1.msra.mxu0 0.0
        %547 = vmatprep.subr.mxu0 0.0
        %548 = vmatpush1.msra.mxu0 0.0
        %549 = vmatprep.subr.mxu0 0.0
        %550 = vmatpush1.msra.mxu0 0.0
        %551 = vmatprep.subr.mxu0 0.0
        %552 = vmatpush1.msra.mxu0 0.0
        %553 = vmatprep.subr.mxu0 0.0
        %554 = vmatpush1.msra.mxu0 0.0
        %555 = vmatprep.subr.mxu0 0.0
        %556 = vmatpush1.msra.mxu0 0.0
        %557 = vmatprep.subr.mxu0 0.0
        %558 = vmatpush1.msra.mxu0 0.0
        %559 = vmatprep.subr.mxu0 0.0
        %560 = vmatpush1.msra.mxu0 0.0
        %561 = vmatprep.subr.mxu0 0.0
        %562 = vmatpush1.msra.mxu0 0.0
        %563 = vmatprep.subr.mxu0 0.0
        %564 = vmatpush1.msra.mxu0 0.0
        %565 = vmatprep.subr.mxu0 0.0
        %566 = vmatpush1.msra.mxu0 0.0
        %567 = vmatprep.subr.mxu0 0.0
        %568 = vmatpush1.msra.mxu0 0.0
        %569 = vmatprep.mubr.f32.mxu0 0.0
        %570 = vmatmul.mubr.f32.gmra.mrb[0].mxu0 %v503
        %v571 = vpop.f32.mrb[0].mxu0
        %v572 = vadd.f32 0.0, %v571
        %v573 = vpop.f32.mrb[0].mxu0
        %574 = vdwg.mxu0
        %v575 = vsel %vm372, %v572, -inf
        %v576 = vrot.slane %v575, 4
        %v577 = vmax.f32 %v575, %v576
        %v578 = vrot.slane %v577, 2
        %v579 = vmax.f32 %v577, %v578
        %v580 = vrot.slane %v579, 1
        %v581 = vmax.f32 %v579, %v580
        %v582 = vsub.f32 %v572, %v581
        %v583 = vmul.f32 %v582, 1.442695
        %v584 = vpow.pop %v583
        %v585 = vsel %vm372, %v584, 0.0
        %v586 = vrot.slane %v585, 4
        %v587 = vadd.f32 %v585, %v586
        %v588 = vrot.slane %v587, 2
        %v589 = vadd.f32 %v587, %v588
        %v590 = vrot.slane %v589, 1
        %v591 = vadd.f32 %v589, %v590
        %v592 = vrcp.pop %v591
        %v593 = vmul.f32 %v584, %v592
        %595 = vrot.lane.b32.xlu0 %v411, 64
        %v596 = vpop.permute.xlu0 %595
        %v598 = vmul.f32 %v593, %v596
        %v599 = vsel %vm372, %v598, 0.0
        %v600 = vrot.slane %v599, 4
        %v601 = vadd.f32 %v599, %v600
        %v602 = vrot.slane %v601, 2
        %v603 = vadd.f32 %v601, %v602
        %v604 = vrot.slane %v603, 1
        %v605 = vadd.f32 %v603, %v604
        %v606 = vpack.c.bf16 %v605, %v605
        %v607 = vld [vmem:[#allocation8] sm:$0xf]
        %v608 = vld [vmem:[#allocation8 + $0x4] sm:$0xf]
        %v609 = vld [vmem:[#allocation8 + $0x8] sm:$0xf]
        %v610 = vld [vmem:[#allocation8 + $0xc] sm:$0xf]
        %v611 = vld [vmem:[#allocation8 + $0x10] sm:$0xf]
        %v612 = vld [vmem:[#allocation8 + $0x14] sm:$0xf]
        %v613 = vld [vmem:[#allocation8 + $0x18] sm:$0xf]
        %v614 = vld [vmem:[#allocation8 + $0x1c] sm:$0xf]
        %v615 = vld [vmem:[#allocation10] sm:$0x1]
        %v624 = vunpack.c.l.b16 %v607
        %v625 = vunpack.c.l.b16 %v608
        %v626 = vunpack.c.l.b16 %v609
        %v627 = vunpack.c.l.b16 %v610
        %v628 = vunpack.c.l.b16 %v611
        %v629 = vunpack.c.l.b16 %v612
        %v630 = vunpack.c.l.b16 %v613
        %v631 = vunpack.c.l.b16 %v614
        %v632 = vpack.c.b16 %v625, %v624
        %v633 = vpack.c.b16 %v627, %v626
        %v634 = vpack.c.b16 %v629, %v628
        %v635 = vpack.c.b16 %v631, %v630
        %v641 = vsel %vm372, %v606, 0
        %643 = vmatprep.subr.bf16.mxu0 0
        %644 = vmatpush1.bf16.msra.mxu0 %v632
        %645 = vmatprep.subr.bf16.mxu0 0
        %646 = vmatpush1.bf16.msra.mxu0 %v633
        %647 = vmatprep.subr.bf16.mxu0 0
        %648 = vmatpush1.bf16.msra.mxu0 %v634
        %649 = vmatprep.subr.bf16.mxu0 0
        %650 = vmatpush1.bf16.msra.mxu0 %v635
        %651 = vmatprep.subr.bf16.mxu0 0
        %652 = vmatpush1.bf16.msra.mxu0 0
        %653 = vmatprep.subr.bf16.mxu0 0
        %654 = vmatpush1.bf16.msra.mxu0 0
        %655 = vmatprep.subr.bf16.mxu0 0
        %656 = vmatpush1.bf16.msra.mxu0 0
        %657 = vmatprep.subr.bf16.mxu0 0
        %658 = vmatpush1.bf16.msra.mxu0 0
        %659 = vmatprep.subr.bf16.mxu0 0
        %660 = vmatpush1.bf16.msra.mxu0 0
        %661 = vmatprep.subr.bf16.mxu0 0
        %662 = vmatpush1.bf16.msra.mxu0 0
        %663 = vmatprep.subr.bf16.mxu0 0
        %664 = vmatpush1.bf16.msra.mxu0 0
        %665 = vmatprep.subr.bf16.mxu0 0
        %666 = vmatpush1.bf16.msra.mxu0 0
        %667 = vmatprep.subr.bf16.mxu0 0
        %668 = vmatpush1.bf16.msra.mxu0 0
        %669 = vmatprep.subr.bf16.mxu0 0
        %670 = vmatpush1.bf16.msra.mxu0 0
        %671 = vmatprep.subr.bf16.mxu0 0
        %672 = vmatpush1.bf16.msra.mxu0 0
        %673 = vmatprep.subr.bf16.mxu0 0
        %674 = vmatpush1.bf16.msra.mxu0 0
        %675 = vmatprep.mubr.bf16.mxu0 0
        %676 = vmatmul.mubr.bf16.gmra.mrb[0].mxu0 %v641
        %v677 = vpop.f32.mrb[0].mxu0
        %v678 = vadd.f32 %v615, %v677
        %v679 = vpop.f32.mrb[0].mxu0
        %v680 = vpop.f32.mrb[0].mxu0
        %v681 = vpop.f32.mrb[0].mxu0
        %682 = vdwg.mxu0
        %vm683 = vcmask 516096
        %684 = vst.msk [vmem:[%s336] sm:$0x1] %vm683, %v678
        %s685 = sand.u32 %s165, 1
        %s686 = scalar_lea.sflag [#allocation4], %s685
        %s687 = sand.u32 %s165, 1
        %s688 = scalar_lea.vmem [#allocation13], %s687
        // Predicated region
        $region69: #{tpu_custom_call.1} parent=43 // pred_check
          %p689 = pneg %p175
        $region70: #{tpu_custom_call.1} parent=43 // pred_check_branch
          %691 = sbr.rel (%p689) target = $region72
        $region71: #{tpu_custom_call.1} parent=43 // pred_region
          %s693 = ssub.s32 16, 16
          %694 = vsyncadd %s686, %s693
          %s695 = smul.addr %s26, 16
          %s696 = scalar_lea.hbm %s6, %s695
          %s698 = sshll.u32 %s688, 4
          %s699 = int_to_ptr.vmem [resolvable:$true] %s698
          %701 = dma.vmem_to_hbm [thread:$0]  %s699, 16, %s696, %s686
        $region72: #{tpu_custom_call.1} parent=43 // pred_fallthru
          _
      $region44: #{tpu_custom_call.1} parent=5 // pred_fallthru
        _
      %p702 = scmp.le.s32.totalorder 2, %s21
      // Predicated region
      $region73: #{tpu_custom_call.1} parent=5 // pred_check
        %p703 = pneg %p702
      $region74: #{tpu_custom_call.1} parent=5 // pred_check_branch
        %705 = sbr.rel (%p703) target = $region76
      $region75: #{tpu_custom_call.1} parent=5 // pred_region
        %s706 = ssub.s32 %s21, 2
        // Predicated region
        $region77: #{tpu_custom_call.1} parent=75 // pred_check
          %p707 = pneg %p181
        $region78: #{tpu_custom_call.1} parent=75 // pred_check_branch
          %709 = sbr.rel (%p707) target = $region80
        $region79: #{tpu_custom_call.1} parent=75 // pred_region
          %s710 = sand.u32 %s166, 1
          %s711 = scalar_lea.sflag [#allocation4], %s710
          %s712 = sand.u32 %s166, 1
          %s713 = scalar_lea.vmem [#allocation13], %s712
          %714 = dma.done %s711, 16
        $region80: #{tpu_custom_call.1} parent=75 // pred_fallthru
          _
      $region76: #{tpu_custom_call.1} parent=5 // pred_fallthru
        _
    $region6: #{tpu_custom_call.1} parent=1 // loop_footer
      %s25 = sadd.s32 1, %s21
    $region7: #{tpu_custom_call.1} parent=1 // loop_footer_branch
      %20 = sbr.rel target = $region3
    $region8: #{tpu_custom_call.1} parent=1 // loop_exit
      _
    %715 = vsyncpa [#allocation3], 1
    %s716 = scalar_lea.sflag [#allocation3], 1
    %717 = vsyncpa %s716, 1
    %718 = vsyncpa [#allocation6], 1
    %719 = vsyncpa [#allocation9], 1
    %720 = vsyncpa [#allocation12], 1
    %721 = vsyncpa [#allocation4], 1
    %s722 = scalar_lea.sflag [#allocation4], 1
    %723 = vsyncpa %s722, 1

</llo_original>
